<compile_context>
chip_gen: v5e
topology: v5e:2x2
jax: 0.10.0
libtpu: 0.0.40
codegen_flags: <defaults>
</compile_context>

<pallas_src>
import jax
import jax.numpy as jnp
from jax.experimental import pallas as pl
from jax.experimental.pallas import tpu as pltpu


_GAMMA = -0.1   # hard-concrete lower stretch limit
_ZETA = 1.1     # hard-concrete upper stretch limit
_LEAK = 0.2     # LeakyReLU negative_slope


# ----------------------------------------------------------------------------
# Pallas kernel: fused  bn1 (folded) -> theta @ x -> L0 gate -> theta^T @ alpha
#                       -> bn6 (scale folded) -> LeakyReLU, channel-first tiles.
# ----------------------------------------------------------------------------
def node_attention_kernel(x_ref, theta_w_ref, g_t_ref, bias_f_ref, b6_ref, o_ref):
    # x_ref: (1, C, tm) channel-first tile of the flattened input.
    x = x_ref[0].astype(jnp.float32)                                       # (C, tm)

    # tensor_product_1 with bn_1 folded:  f = (theta * s1) @ x + theta @ b1
    f = jnp.dot(theta_w_ref[...], x, preferred_element_type=jnp.float32)   # (N, tm)
    f = f + bias_f_ref[...]                                                # (N,1) bcast

    # LZeroNorm: deterministic hard-concrete gate, alpha = f * gate
    gate = jnp.clip(jax.nn.sigmoid(f) * (_ZETA - _GAMMA) + _GAMMA, 0.0, 1.0)
    alpha = f * gate

    # tensor_product_2 with bn_6 scale folded:  y = (theta^T * s6) @ alpha + b6
    y = jnp.dot(g_t_ref[...], alpha, preferred_element_type=jnp.float32)   # (C, tm)
    y = y + b6_ref[...]                                                    # (C,1) bcast
    y = jnp.where(y > 0.0, y, _LEAK * y)                                   # LeakyReLU(0.2)
    o_ref[0] = y.astype(o_ref.dtype)


# ----------------------------------------------------------------------------
# Helpers
# ----------------------------------------------------------------------------
def _bn_affine(gamma, beta, mean, var, eps=1e-5):
    scale = gamma / jnp.sqrt(var + eps)
    shift = beta - mean * scale
    return scale, shift


def _choose_tile(m, c, itemsize, vmem_budget_bytes=16 * 1024 * 1024):
    """Largest lane tile (multiple of 128) whose double-buffered in+out fits budget."""
    bytes_per_col = 2 * 2 * c * max(int(itemsize), 4)   # in+out, 2x buffered, f32 bound
    tm = max(128, (vmem_budget_bytes // bytes_per_col) // 128 * 128)
    return m if m <= tm else tm


# ----------------------------------------------------------------------------
# Wrapper: parameter folding + pallas_call
# ----------------------------------------------------------------------------
def node_attention_forward(x, params, *, tm=None):
    n, c, t, h, w = x.shape
    nodes = params["nodes"]                            # (N, C)
    n_nodes = nodes.shape[0]

    # --- theta = bn_3(linear_1(bn_2(nodes))) : tiny (N, C), plain-JAX glue ---
    s2, b2 = _bn_affine(*params["bn2"])                # per channel C
    theta = nodes * s2[None, :] + b2[None, :]          # bn_2
    theta = theta @ params["lin_w"].T + params["lin_b"]  # linear_1
    s3, b3 = _bn_affine(*params["bn3"])                # per node N (dim=0)
    theta = (theta * s3[:, None] + b3[:, None]).astype(jnp.float32)   # bn_3

    # --- fold bn_1 into theta and bn_6's scale into theta^T (O(N*C), once) ---
    s1, b1 = _bn_affine(*params["bn1"])                # (C,)
    s6, b6 = _bn_affine(*params["bn6"])                # (C,)
    theta_w = (theta * s1[None, :]).astype(jnp.float32)          # (N, C)
    bias_f = (theta @ b1).reshape(n_nodes, 1).astype(jnp.float32)  # (N, 1)
    g_t = (theta.T * s6[:, None]).astype(jnp.float32)            # (C, N)
    b6_col = b6.reshape(c, 1).astype(jnp.float32)                # (C, 1)

    # --- channel-first flatten (free reshape, no transpose) ---
    m = t * h * w
    x_flat = x.reshape(n, c, m)
    if tm is None:
        tm = _choose_tile(m, c, jnp.dtype(x.dtype).itemsize)
    grid = (n, pl.cdiv(m, tm))      # remainder tile handled by Pallas block clipping

    out = pl.pallas_call(
        node_attention_kernel,
        out_shape=jax.ShapeDtypeStruct((n, c, m), x.dtype),
        grid_spec=pltpu.PrefetchScalarGridSpec(
            num_scalar_prefetch=0,
            grid=grid,
            in_specs=[
                pl.BlockSpec((1, c, tm), lambda b, j: (b, 0, j)),   # x tile
                pl.BlockSpec((n_nodes, c), lambda b, j: (0, 0)),    # theta*s1   (resident)
                pl.BlockSpec((c, n_nodes), lambda b, j: (0, 0)),    # theta^T*s6 (resident)
                pl.BlockSpec((n_nodes, 1), lambda b, j: (0, 0)),    # theta@b1   (resident)
                pl.BlockSpec((c, 1), lambda b, j: (0, 0)),          # b6         (resident)
            ],
            out_specs=pl.BlockSpec((1, c, tm), lambda b, j: (b, 0, j)),
        ),
        compiler_params=pltpu.CompilerParams(
            dimension_semantics=("parallel", "parallel")),
    )(x_flat, theta_w, g_t, bias_f, b6_col)

    # (n, C, M) -> (n, C, T, H, W): free reshape, output already channel-first.
    return out.reshape(n, c, t, h, w)


# ----------------------------------------------------------------------------
# Deterministic synthetic parameter init (shapes from __init__)
# ----------------------------------------------------------------------------
def init_params(key, n_channels, n_nodes):
    ks = jax.random.split(key, 12)

    def bn(kw, kb, num_features):
        gamma = 1.0 + 0.1 * jax.random.normal(kw, (num_features,), jnp.float32)
        beta = 0.1 * jax.random.normal(kb, (num_features,), jnp.float32)
        mean = jnp.zeros((num_features,), jnp.float32)
        var = jnp.ones((num_features,), jnp.float32)
        return (gamma, beta, mean, var)

    return {
        "nodes": jax.random.normal(ks[0], (n_nodes, n_channels), jnp.float32),
        "lin_w": jax.random.normal(ks[1], (n_channels, n_channels), jnp.float32)
                 / jnp.sqrt(n_channels),
        "lin_b": 0.1 * jax.random.normal(ks[2], (n_channels,), jnp.float32),
        "bn1": bn(ks[3], ks[4], n_channels),     # nn.BatchNorm3d(C)
        "bn2": bn(ks[5], ks[6], n_channels),     # nn.BatchNorm1d(C)
        "bn3": bn(ks[7], ks[8], n_nodes),        # pl.BatchNorm(N, dim=0)
        "bn6": bn(ks[9], ks[10], n_channels),    # nn.BatchNorm3d(C)
    }


if __name__ == "__main__":
    key = jax.random.PRNGKey(0)
    k_in, k_par = jax.random.split(key)

    # small shapes consistent with the module: (n, C, T, H, W), nodes (N, C)
    n, C, T, H, W = 2, 32, 4, 8, 8
    N_NODES = 16

    x = jax.random.normal(k_in, (n, C, T, H, W), jnp.float32)
    params = init_params(k_par, C, N_NODES)

    y = node_attention_forward(x, params)
    jax.block_until_ready(y)
    assert y.shape == (n, C, T, H, W)
    print("KERNEL_OK")
</pallas_src>

<mosaic_0001>
module attributes {stable_mosaic.version = 11 : i64} {
  func.func @node_attention_kernel(%arg0: i32, %arg1: i32, %arg2: memref<1x32x256xf32, #tpu.memory_space<vmem>>, %arg3: memref<16x32xf32, #tpu.memory_space<vmem>>, %arg4: memref<32x16xf32, #tpu.memory_space<vmem>>, %arg5: memref<16x1xf32, #tpu.memory_space<vmem>>, %arg6: memref<32x1xf32, #tpu.memory_space<vmem>>, %arg7: memref<1x32x256xf32, #tpu.memory_space<vmem>>) attributes {dimension_semantics = [#tpu.dimension_semantics<parallel>, #tpu.dimension_semantics<parallel>], iteration_bounds = array<i64: 2, 1>, scalar_prefetch = 0 : i64, scratch_operands = 0 : i64, tpu.core_type = #tpu.core_type<tc>, window_params = [{transform_indices = @transform_0, window_bounds = array<i64: 1, 32, 256>}, {pipeline_mode = #tpu.pipeline_mode<synchronous>, transform_indices = @transform_1, window_bounds = array<i64: 16, 32>}, {pipeline_mode = #tpu.pipeline_mode<synchronous>, transform_indices = @transform_2, window_bounds = array<i64: 32, 16>}, {pipeline_mode = #tpu.pipeline_mode<synchronous>, transform_indices = @transform_3, window_bounds = array<i64: 16, 1>}, {pipeline_mode = #tpu.pipeline_mode<synchronous>, transform_indices = @transform_4, window_bounds = array<i64: 32, 1>}, {transform_indices = @transform_5, window_bounds = array<i64: 1, 32, 256>}]} {
    %c0 = arith.constant 0 : index
    %c0_0 = arith.constant 0 : index
    %c0_1 = arith.constant 0 : index
    %0 = vector.load %arg2[%c0, %c0_0, %c0_1] : memref<1x32x256xf32, #tpu.memory_space<vmem>>, vector<1x32x256xf32>
    %1 = vector.shape_cast %0 : vector<1x32x256xf32> to vector<32x256xf32>
    %c0_2 = arith.constant 0 : index
    %c0_3 = arith.constant 0 : index
    %2 = vector.load %arg3[%c0_2, %c0_3] : memref<16x32xf32, #tpu.memory_space<vmem>>, vector<16x32xf32>
    %cst = arith.constant dense<0.000000e+00> : vector<16x256xf32>
    %3 = tpu.matmul %2, %1, %cst {dimension_numbers = #tpu.dot_dimension_numbers<[1], [0], [0], [1], [0, 0, 1, 1], [], []>} : vector<16x32xf32>, vector<32x256xf32>, vector<16x256xf32> -> vector<16x256xf32>
    %c0_4 = arith.constant 0 : index
    %c0_5 = arith.constant 0 : index
    %4 = vector.load %arg5[%c0_4, %c0_5] : memref<16x1xf32, #tpu.memory_space<vmem>>, vector<16x1xf32>
    %5 = vector.broadcast %4 : vector<16x1xf32> to vector<16x256xf32>
    %6 = arith.addf %3, %5 : vector<16x256xf32>
    %7 = arith.negf %6 : vector<16x256xf32>
    %8 = math.exp %7 : vector<16x256xf32>
    %cst_6 = arith.constant 1.000000e+00 : f32
    %9 = vector.broadcast %cst_6 : f32 to vector<16x256xf32>
    %10 = arith.addf %9, %8 : vector<16x256xf32>
    %11 = arith.divf %9, %10 : vector<16x256xf32>
    %cst_7 = arith.constant 1.200000e+00 : f32
    %12 = vector.broadcast %cst_7 : f32 to vector<16x256xf32>
    %13 = arith.mulf %11, %12 : vector<16x256xf32>
    %cst_8 = arith.constant -1.000000e-01 : f32
    %14 = vector.broadcast %cst_8 : f32 to vector<16x256xf32>
    %15 = arith.addf %13, %14 : vector<16x256xf32>
    %cst_9 = arith.constant 0.000000e+00 : f32
    %cst_10 = arith.constant 1.000000e+00 : f32
    %16 = vector.broadcast %cst_9 : f32 to vector<16x256xf32>
    %17 = arith.maximumf %16, %15 : vector<16x256xf32>
    %18 = vector.broadcast %cst_10 : f32 to vector<16x256xf32>
    %19 = arith.minimumf %18, %17 : vector<16x256xf32>
    %20 = arith.mulf %6, %19 : vector<16x256xf32>
    %c0_11 = arith.constant 0 : index
    %c0_12 = arith.constant 0 : index
    %21 = vector.load %arg4[%c0_11, %c0_12] : memref<32x16xf32, #tpu.memory_space<vmem>>, vector<32x16xf32>
    %cst_13 = arith.constant dense<0.000000e+00> : vector<32x256xf32>
    %22 = tpu.matmul %21, %20, %cst_13 {dimension_numbers = #tpu.dot_dimension_numbers<[1], [0], [0], [1], [0, 0, 1, 1], [], []>} : vector<32x16xf32>, vector<16x256xf32>, vector<32x256xf32> -> vector<32x256xf32>
    %c0_14 = arith.constant 0 : index
    %c0_15 = arith.constant 0 : index
    %23 = vector.load %arg6[%c0_14, %c0_15] : memref<32x1xf32, #tpu.memory_space<vmem>>, vector<32x1xf32>
    %24 = vector.broadcast %23 : vector<32x1xf32> to vector<32x256xf32>
    %25 = arith.addf %22, %24 : vector<32x256xf32>
    %cst_16 = arith.constant 0.000000e+00 : f32
    %26 = vector.broadcast %cst_16 : f32 to vector<32x256xf32>
    %27 = arith.cmpf ogt, %25, %26 : vector<32x256xf32>
    %cst_17 = arith.constant 2.000000e-01 : f32
    %28 = vector.broadcast %cst_17 : f32 to vector<32x256xf32>
    %29 = arith.mulf %28, %25 : vector<32x256xf32>
    %30 = arith.select %27, %25, %29 : vector<32x256xi1>, vector<32x256xf32>
    %c0_18 = arith.constant 0 : index
    %c0_19 = arith.constant 0 : index
    %c0_20 = arith.constant 0 : index
    %31 = vector.load %arg7[%c0_18, %c0_19, %c0_20] : memref<1x32x256xf32, #tpu.memory_space<vmem>>, vector<1x32x256xf32>
    %32 = vector.shape_cast %31 : vector<1x32x256xf32> to vector<32x256xf32>
    %33 = vector.shape_cast %30 : vector<32x256xf32> to vector<1x32x256xf32>
    tpu.vector_store %arg7[%c0_18, %c0_19, %c0_20], %33 {strides = array<i32>} : memref<1x32x256xf32, #tpu.memory_space<vmem>>, vector<1x32x256xf32>,
    return
  }
  func.func @transform_0(%arg0: i32, %arg1: i32) -> (i32, i32, i32) {
    %c0_i32 = arith.constant 0 : i32
    %c0_i32_0 = arith.constant 0 : i32
    return %arg0, %c0_i32, %arg1 : i32, i32, i32
  }
  func.func @transform_1(%arg0: i32, %arg1: i32) -> (i32, i32) {
    %c0_i32 = arith.constant 0 : i32
    %c0_i32_0 = arith.constant 0 : i32
    %c0_i32_1 = arith.constant 0 : i32
    return %c0_i32, %c0_i32_0 : i32, i32
  }
  func.func @transform_2(%arg0: i32, %arg1: i32) -> (i32, i32) {
    %c0_i32 = arith.constant 0 : i32
    %c0_i32_0 = arith.constant 0 : i32
    %c0_i32_1 = arith.constant 0 : i32
    return %c0_i32, %c0_i32_0 : i32, i32
  }
  func.func @transform_3(%arg0: i32, %arg1: i32) -> (i32, i32) {
    %c0_i32 = arith.constant 0 : i32
    %c0_i32_0 = arith.constant 0 : i32
    %c0_i32_1 = arith.constant 0 : i32
    return %c0_i32, %c0_i32_0 : i32, i32
  }
  func.func @transform_4(%arg0: i32, %arg1: i32) -> (i32, i32) {
    %c0_i32 = arith.constant 0 : i32
    %c0_i32_0 = arith.constant 0 : i32
    %c0_i32_1 = arith.constant 0 : i32
    return %c0_i32, %c0_i32_0 : i32, i32
  }
  func.func @transform_5(%arg0: i32, %arg1: i32) -> (i32, i32, i32) {
    %c0_i32 = arith.constant 0 : i32
    %c0_i32_0 = arith.constant 0 : i32
    return %arg0, %c0_i32, %arg1 : i32, i32, i32
  }
}

</mosaic_0001>

<llo_original>
// kernel: tpu_custom_call.1
$region0: #{tpu_custom_call.1}
  #allocation0 [shape = 'u32[]', space=smem, size = 0x4, offset = 0x4, fixed_abs, tag = 'smem constant byte address 0x4 - core index']
  #allocation1 [shape = 'u32[72,128]{1,0:T(1,128)}', space=vmem, size = 0x9000, scoped, tag = 'internal scratch']
  %s0 = inlined_call_operand.hbm [shape: f32[2,32,256], index: 0, kind: input, shape index: {}]
  %s1 = inlined_call_operand.vmem [shape: f32[16,32], index: 1, kind: input, shape index: {}]
  %s2 = inlined_call_operand.vmem [shape: f32[32,16], index: 2, kind: input, shape index: {}]
  %s3 = inlined_call_operand.vmem [shape: f32[16,1], index: 3, kind: input, shape index: {}]
  %s4 = inlined_call_operand.vmem [shape: f32[32,1], index: 4, kind: input, shape index: {}]
  %s5 = inlined_call_operand.hbm [shape: f32[2,32,256], index: 5, kind: output, shape index: {}]
  %s6 = sld [smem:[#allocation0]]
  $region57: #{tpu_custom_call.1} parent=0
    _
  %s8 = ssub.s32 1, %s6
  %s9 = scalar_select 0, %s8, %s6
  $region1: #{tpu_custom_call.1} parent=0
    #allocation2 [shape = 'u8[65536]{0}', space=vmem, size = 0x10000, scoped, tag = 'input window, operand 0']
    #allocation3 [shape = 's32[2]{0}', space=sflag, size = 0x8, scoped, tag = 'scoped memory for tpu_custom_call.1']
    #allocation4 [shape = 's32[2]{0}', space=sflag, size = 0x8, scoped, tag = 'scoped memory for tpu_custom_call.1']
    #allocation5 [shape = 'u8[65536]{0}', space=vmem, size = 0x10000, scoped, tag = 'output window, operand 0']
    %10 = vsyncpa [#allocation3], 0
    %s11 = scalar_lea.sflag [#allocation3], 1
    %12 = vsyncpa %s11, 0
    %13 = vsyncpa [#allocation4], 0
    %s14 = scalar_lea.sflag [#allocation4], 1
    %15 = vsyncpa %s14, 0
    loop: start=0, step=1, limit=4
    $region2: #{tpu_custom_call.1} parent=1 // loop_pre_header
      _
    $region3: #{tpu_custom_call.1} parent=1 // loop_header
      %s17 = sphi 0, %s21
      %p18 = scmp.ge.s32.totalorder %s17, 4
      %s24 = sphi 0, %s36
      %s25 = sphi 0, %s32
      %s26 = sphi 0, %s24
      %s27 = sphi 0, %s25
      %s28 = sphi 0, %s26
      %s29 = sphi 0, %s27
      %s41 = sphi 0, %s43
      %s44 = sphi 0, %s41
      %s45 = sphi 0, %s44
      %s61 = sphi 0, %s45
      %s65 = sphi 0, %s65
      %s67 = sphi 0, %s65
      %s68 = sphi 0, %s67
      %s82 = sphi 0, %s68
      %s86 = sphi 0, %s86
      %s88 = sphi 0, %s86
      %s89 = sphi 0, %s88
      %s103 = sphi 0, %s89
      %s107 = sphi 0, %s107
      %s109 = sphi 0, %s107
      %s110 = sphi 0, %s109
      %s124 = sphi 0, %s110
      %s128 = sphi 0, %s128
      %s130 = sphi 0, %s128
      %s131 = sphi 0, %s130
      %s145 = sphi 0, %s131
      %s153 = sphi 0, %s155
      %s156 = sphi 0, %s153
      %s157 = sphi 0, %s156
      %s173 = sphi 0, %s157
    $region4: #{tpu_custom_call.1} parent=1 // loop_header_branch
      %20 = sbr.rel (%p18) target = $region8
    $region5: #{tpu_custom_call.1} parent=1 // loop_body
      %s22 = ssub.s32 %s17, 1
      %s23 = ssub.s32 %s17, 2
      %s30 = sadd.s32 1, %s25
      %p31 = scmp.ge.s32.totalorder %s30, 1
      %s32 = scalar_select %p31, 0, %s30
      %s33 = sadd.s32 1, %s24
      %s34 = scalar_select %p31, %s33, %s24
      %p35 = scmp.ge.s32.totalorder %s34, 2
      %s36 = scalar_select %p35, 0, %s34
      %s37 = ssub.s32 %s24, %s36
      %s38 = ssub.s32 %s25, %s32
      %s39 = sor.u32 %s37, %s38
      %p40 = scmp.eq.s32.totalorder %s39, 0
      %s42 = sadd.s32 %s41, 1
      %s43 = scalar_select %p40, %s41, %s42
      %p46 = pneg %p40
      %p47 = scmp.eq.s32.totalorder %s17, 1
      %p48 = por %p46, %p47
      %p49 = scmp.ne.s32.totalorder %s41, %s44
      %p50 = scmp.eq.s32.totalorder %s17, 0
      %p51 = por %p49, %p50
      %p52 = scmp.ne.s32.totalorder %s41, %s44
      %p53 = scmp.eq.s32.totalorder %s22, 1
      %p54 = por %p52, %p53
      %p55 = scmp.ne.s32.totalorder %s44, %s45
      %p56 = scmp.eq.s32.totalorder %s22, 0
      %p57 = por %p55, %p56
      %p58 = scmp.ne.s32.totalorder %s44, %s45
      %p59 = scmp.eq.s32.totalorder %s23, 1
      %p60 = por %p58, %p59
      %p62 = scmp.ne.s32.totalorder %s45, %s61
      %p63 = scmp.eq.s32.totalorder %s23, 0
      %p64 = por %p62, %p63
      %s66 = sadd.s32 %s65, 1
      %p69 = scmp.eq.s32.totalorder %s17, 1
      %p70 = scmp.ne.s32.totalorder %s65, %s67
      %p71 = scmp.eq.s32.totalorder %s17, 0
      %p72 = por %p70, %p71
      %p73 = scmp.ne.s32.totalorder %s65, %s67
      %p74 = scmp.eq.s32.totalorder %s22, 1
      %p75 = por %p73, %p74
      %p76 = scmp.ne.s32.totalorder %s67, %s68
      %p77 = scmp.eq.s32.totalorder %s22, 0
      %p78 = por %p76, %p77
      %p79 = scmp.ne.s32.totalorder %s67, %s68
      %p80 = scmp.eq.s32.totalorder %s23, 1
      %p81 = por %p79, %p80
      %p83 = scmp.ne.s32.totalorder %s68, %s82
      %p84 = scmp.eq.s32.totalorder %s23, 0
      %p85 = por %p83, %p84
      %s87 = sadd.s32 %s86, 1
      %p90 = scmp.eq.s32.totalorder %s17, 1
      %p91 = scmp.ne.s32.totalorder %s86, %s88
      %p92 = scmp.eq.s32.totalorder %s17, 0
      %p93 = por %p91, %p92
      %p94 = scmp.ne.s32.totalorder %s86, %s88
      %p95 = scmp.eq.s32.totalorder %s22, 1
      %p96 = por %p94, %p95
      %p97 = scmp.ne.s32.totalorder %s88, %s89
      %p98 = scmp.eq.s32.totalorder %s22, 0
      %p99 = por %p97, %p98
      %p100 = scmp.ne.s32.totalorder %s88, %s89
      %p101 = scmp.eq.s32.totalorder %s23, 1
      %p102 = por %p100, %p101
      %p104 = scmp.ne.s32.totalorder %s89, %s103
      %p105 = scmp.eq.s32.totalorder %s23, 0
      %p106 = por %p104, %p105
      %s108 = sadd.s32 %s107, 1
      %p111 = scmp.eq.s32.totalorder %s17, 1
      %p112 = scmp.ne.s32.totalorder %s107, %s109
      %p113 = scmp.eq.s32.totalorder %s17, 0
      %p114 = por %p112, %p113
      %p115 = scmp.ne.s32.totalorder %s107, %s109
      %p116 = scmp.eq.s32.totalorder %s22, 1
      %p117 = por %p115, %p116
      %p118 = scmp.ne.s32.totalorder %s109, %s110
      %p119 = scmp.eq.s32.totalorder %s22, 0
      %p120 = por %p118, %p119
      %p121 = scmp.ne.s32.totalorder %s109, %s110
      %p122 = scmp.eq.s32.totalorder %s23, 1
      %p123 = por %p121, %p122
      %p125 = scmp.ne.s32.totalorder %s110, %s124
      %p126 = scmp.eq.s32.totalorder %s23, 0
      %p127 = por %p125, %p126
      %s129 = sadd.s32 %s128, 1
      %p132 = scmp.eq.s32.totalorder %s17, 1
      %p133 = scmp.ne.s32.totalorder %s128, %s130
      %p134 = scmp.eq.s32.totalorder %s17, 0
      %p135 = por %p133, %p134
      %p136 = scmp.ne.s32.totalorder %s128, %s130
      %p137 = scmp.eq.s32.totalorder %s22, 1
      %p138 = por %p136, %p137
      %p139 = scmp.ne.s32.totalorder %s130, %s131
      %p140 = scmp.eq.s32.totalorder %s22, 0
      %p141 = por %p139, %p140
      %p142 = scmp.ne.s32.totalorder %s130, %s131
      %p143 = scmp.eq.s32.totalorder %s23, 1
      %p144 = por %p142, %p143
      %p146 = scmp.ne.s32.totalorder %s131, %s145
      %p147 = scmp.eq.s32.totalorder %s23, 0
      %p148 = por %p146, %p147
      %s149 = ssub.s32 %s24, %s36
      %s150 = ssub.s32 %s25, %s32
      %s151 = sor.u32 %s149, %s150
      %p152 = scmp.eq.s32.totalorder %s151, 0
      %s154 = sadd.s32 %s153, 1
      %s155 = scalar_select %p152, %s153, %s154
      %p158 = pneg %p152
      %p159 = scmp.eq.s32.totalorder %s17, 1
      %p160 = por %p158, %p159
      %p161 = scmp.ne.s32.totalorder %s153, %s156
      %p162 = scmp.eq.s32.totalorder %s17, 0
      %p163 = por %p161, %p162
      %p164 = scmp.ne.s32.totalorder %s153, %s156
      %p165 = scmp.eq.s32.totalorder %s22, 1
      %p166 = por %p164, %p165
      %p167 = scmp.ne.s32.totalorder %s156, %s157
      %p168 = scmp.eq.s32.totalorder %s22, 0
      %p169 = por %p167, %p168
      %p170 = scmp.ne.s32.totalorder %s156, %s157
      %p171 = scmp.eq.s32.totalorder %s23, 1
      %p172 = por %p170, %p171
      %p174 = scmp.ne.s32.totalorder %s157, %s173
      %p175 = scmp.eq.s32.totalorder %s23, 0
      %p176 = por %p174, %p175
      %p177 = scmp.le.s32.totalorder 1, %s17
      %p178 = scmp.lt.s32.totalorder %s17, 3
      %p179 = pnand %p177, %p178
      %p180 = pneg %p179
      // Predicated region
      $region9: #{tpu_custom_call.1} parent=5 // pred_check
        _
      $region10: #{tpu_custom_call.1} parent=5 // pred_check_branch
        %182 = sbr.rel (%p179) target = $region12
      $region11: #{tpu_custom_call.1} parent=5 // pred_region
        %s183 = ssub.s32 %s17, 1
        // Predicated region
        $region13: #{tpu_custom_call.1} parent=11 // pred_check
          %p184 = pneg %p78
        $region14: #{tpu_custom_call.1} parent=11 // pred_check_branch
          %186 = sbr.rel (%p184) target = $region16
        $region15: #{tpu_custom_call.1} parent=11 // pred_region
          _
        $region16: #{tpu_custom_call.1} parent=11 // pred_fallthru
          _
        // Predicated region
        $region17: #{tpu_custom_call.1} parent=11 // pred_check
          %p187 = pneg %p99
        $region18: #{tpu_custom_call.1} parent=11 // pred_check_branch
          %189 = sbr.rel (%p187) target = $region20
        $region19: #{tpu_custom_call.1} parent=11 // pred_region
          _
        $region20: #{tpu_custom_call.1} parent=11 // pred_fallthru
          _
        // Predicated region
        $region21: #{tpu_custom_call.1} parent=11 // pred_check
          %p190 = pneg %p120
        $region22: #{tpu_custom_call.1} parent=11 // pred_check_branch
          %192 = sbr.rel (%p190) target = $region24
        $region23: #{tpu_custom_call.1} parent=11 // pred_region
          _
        $region24: #{tpu_custom_call.1} parent=11 // pred_fallthru
          _
        // Predicated region
        $region25: #{tpu_custom_call.1} parent=11 // pred_check
          %p193 = pneg %p141
        $region26: #{tpu_custom_call.1} parent=11 // pred_check_branch
          %195 = sbr.rel (%p193) target = $region28
        $region27: #{tpu_custom_call.1} parent=11 // pred_region
          _
        $region28: #{tpu_custom_call.1} parent=11 // pred_fallthru
          _
      $region12: #{tpu_custom_call.1} parent=5 // pred_fallthru
        _
      %p196 = scmp.lt.s32.totalorder %s17, 2
      // Predicated region
      $region29: #{tpu_custom_call.1} parent=5 // pred_check
        %p197 = pneg %p196
      $region30: #{tpu_custom_call.1} parent=5 // pred_check_branch
        %199 = sbr.rel (%p197) target = $region32
      $region31: #{tpu_custom_call.1} parent=5 // pred_region
        // Predicated region
        $region33: #{tpu_custom_call.1} parent=31 // pred_check
          %p200 = pneg %p51
        $region34: #{tpu_custom_call.1} parent=31 // pred_check_branch
          %202 = sbr.rel (%p200) target = $region36
        $region35: #{tpu_custom_call.1} parent=31 // pred_region
          %s203 = sand.u32 %s41, 1
          %s204 = scalar_lea.sflag [#allocation3], %s203
          %s205 = sand.u32 %s41, 1
          %s206 = smul.addr %s205, 64
          %s207 = scalar_lea.vmem [#allocation2], %s206
          %s208 = smul.u32 2, %s25
          %210 = vsyncadd %s204, 0
          %s211 = smul.addr %s24, 8
          %s212 = sadd.s32 %s208, %s211
          %s213 = smul.addr %s212, 8
          %s214 = scalar_lea.hbm %s0, %s213
          %s215 = sshll.u32 %s214, 4
          %s216 = int_to_ptr.hbm [resolvable:$true] %s215
          %s217 = sshll.u32 %s207, 4
          %s218 = int_to_ptr.vmem [resolvable:$true] %s217
          %223 = dma.hbm_to_vmem [thread:$0]  %s216, 1024, %s218, %s204, 256, 256, 16
        $region36: #{tpu_custom_call.1} parent=31 // pred_fallthru
          _
      $region32: #{tpu_custom_call.1} parent=5 // pred_fallthru
        _
      %p224 = scmp.le.s32.totalorder 1, %s17
      %p225 = scmp.lt.s32.totalorder %s17, 3
      %p226 = pnand %p224, %p225
      %p227 = pneg %p226
      // Predicated region
      $region37: #{tpu_custom_call.1} parent=5 // pred_check
        _
      $region38: #{tpu_custom_call.1} parent=5 // pred_check_branch
        %229 = sbr.rel (%p226) target = $region40
      $region39: #{tpu_custom_call.1} parent=5 // pred_region
        %s230 = ssub.s32 %s17, 1
        %s231 = sand.u32 %s44, 1
        %s232 = scalar_lea.sflag [#allocation3], %s231
        %s233 = sand.u32 %s44, 1
        %s234 = smul.addr %s233, 64
        %s235 = scalar_lea.vmem [#allocation2], %s234
        // Predicated region
        $region41: #{tpu_custom_call.1} parent=39 // pred_check
          %p236 = pneg %p57
        $region42: #{tpu_custom_call.1} parent=39 // pred_check_branch
          %238 = sbr.rel (%p236) target = $region44
        $region43: #{tpu_custom_call.1} parent=39 // pred_region
          %240 = dma.done %s232, 1024
        $region44: #{tpu_custom_call.1} parent=39 // pred_fallthru
          _
        %s241 = sand.u32 %s44, 1
        %s242 = scalar_lea.sflag [#allocation3], %s241
        %s243 = sand.u32 %s44, 1
        %s244 = smul.addr %s243, 64
        %s245 = scalar_lea.vmem [#allocation2], %s244
        %p246 = pneg %p57
        %p247 = pneg %p54
        %p248 = pneg %p78
        %p249 = pneg %p75
        %p250 = pneg %p99
        %p251 = pneg %p96
        %p252 = pneg %p120
        %p253 = pneg %p117
        %p254 = pneg %p141
        %p255 = pneg %p138
        %p256 = pneg %p169
        %p257 = pneg %p166
        %s258 = sand.u32 %s156, 1
        %s259 = scalar_lea.sflag [#allocation4], %s258
        %s260 = sand.u32 %s156, 1
        %s261 = smul.addr %s260, 64
        %s262 = scalar_lea.vmem [#allocation5], %s261
        %s263 = smul.u32 2, %s27
        %s264 = smul.u32 2, %s27
        %v265 = vld [vmem:[%s235] sm:$0xff]
        %v266 = vld [vmem:[%s235 + $0x8] sm:$0xff]
        %v267 = vld [vmem:[%s235 + $0x10] sm:$0xff]
        %v268 = vld [vmem:[%s235 + $0x18] sm:$0xff]
        %v269 = vld [vmem:[%s235 + $0x20] sm:$0xff]
        %v270 = vld [vmem:[%s235 + $0x28] sm:$0xff]
        %v271 = vld [vmem:[%s235 + $0x30] sm:$0xff]
        %v272 = vld [vmem:[%s235 + $0x38] sm:$0xff]
        %v273 = vld [vmem:[%s1] sm:$0xff]
        %v274 = vld [vmem:[%s1 + $0x8] sm:$0xff]
        %v275 = vld [vmem:[%s3] sm:$0xff]
        %v276 = vld [vmem:[%s3 + $0x8] sm:$0xff]
        %278 = vset.pattern.permute.xlu0 0
        %279 = vperm.xlu0 %278, %v275
        %v280 = vpop.permute.xlu0 %279
        %283 = vset.pattern.permute.xlu0 0
        %284 = vperm.xlu0 %283, %v276
        %v285 = vpop.permute.xlu0 %284
        %vm287 = vcmask 261120
        %v289 = vsel %vm287, %v273, 0
        %v292 = vsel %vm287, %v274, 0
        %294 = vmatpush.msra.mxu0 0.0
        %295 = vmatpush.msra.mxu0 0.0
        %296 = vmatpush.msra.mxu0 0.0
        %297 = vmatpush.msra.mxu0 0.0
        %298 = vmatpush.msra.mxu0 0.0
        %299 = vmatpush.msra.mxu0 0.0
        %300 = vmatpush.msra.mxu0 0.0
        %301 = vmatpush.msra.mxu0 0.0
        %302 = vmatpush.msra.mxu0 0.0
        %303 = vmatpush.msra.mxu0 0.0
        %304 = vmatpush.msra.mxu0 0.0
        %305 = vmatpush.msra.mxu0 0.0
        %306 = vmatpush.msra.mxu0 %v271
        %307 = vmatpush.msra.mxu0 %v269
        %308 = vmatpush.msra.mxu0 %v267
        %309 = vmatpush.msra.mxu0 %v265
        %310 = vmatmul.f32.gmra.mxu0 %v289
        %v311 = vpop.f32.mrf.mxu0
        %v312 = vadd.f32 %v280, %v311
        %313 = vmatmul.f32.gmra.mxu0 %v292
        %v314 = vpop.f32.mrf.mxu0
        %v315 = vadd.f32 %v285, %v314
        %316 = vdwg.mxu0
        %317 = vmatpush.msra.mxu0 0.0
        %318 = vmatpush.msra.mxu0 0.0
        %319 = vmatpush.msra.mxu0 0.0
        %320 = vmatpush.msra.mxu0 0.0
        %321 = vmatpush.msra.mxu0 0.0
        %322 = vmatpush.msra.mxu0 0.0
        %323 = vmatpush.msra.mxu0 0.0
        %324 = vmatpush.msra.mxu0 0.0
        %325 = vmatpush.msra.mxu0 0.0
        %326 = vmatpush.msra.mxu0 0.0
        %327 = vmatpush.msra.mxu0 0.0
        %328 = vmatpush.msra.mxu0 0.0
        %329 = vmatpush.msra.mxu0 %v272
        %330 = vmatpush.msra.mxu0 %v270
        %331 = vmatpush.msra.mxu0 %v268
        %332 = vmatpush.msra.mxu0 %v266
        %333 = vmatmul.f32.gmra.mxu0 %v289
        %v334 = vpop.f32.mrf.mxu0
        %v335 = vadd.f32 %v280, %v334
        %336 = vmatmul.f32.gmra.mxu0 %v292
        %v337 = vpop.f32.mrf.mxu0
        %v338 = vadd.f32 %v285, %v337
        %339 = vdwg.mxu0
        %v340 = vxor.u32 %v312, 2147483648
        %v341 = vxor.u32 %v335, 2147483648
        %v342 = vxor.u32 %v315, 2147483648
        %v343 = vxor.u32 %v338, 2147483648
        %v344 = vmul.f32 %v340, 1.442695
        %v345 = vpow.pop %v344
        %v346 = vmul.f32 %v341, 1.442695
        %v347 = vpow.pop %v346
        %v348 = vmul.f32 %v342, 1.442695
        %v349 = vpow.pop %v348
        %v350 = vmul.f32 %v343, 1.442695
        %v351 = vpow.pop %v350
        %v352 = vadd.f32 %v345, 1.0
        %v353 = vadd.f32 %v347, 1.0
        %v354 = vadd.f32 %v349, 1.0
        %v355 = vadd.f32 %v351, 1.0
        %v356 = vrcp.pop %v352
        %v357 = vmul.f32 %v352, %v356
        %v358 = vsub.f32 1.0, %v357
        %v359 = vmul.f32 %v356, %v358
        %v360 = vadd.f32 %v356, %v359
        %vm361 = vweird.f32 %v352
        %vm362 = vweird.f32 %v356
        %vm363 = vmor %vm361, %vm362
        %v364 = vsel %vm363, %v356, %v360
        %v365 = vand.u32 2147483647, %v352
        %vm366 = vcmp.eq.f32.partialorder %v365, 8.507059e+37
        %v367 = vand.u32 %v352, 2147483648
        %v368 = vor.u32 1.1754944e-38, %v367
        %v369 = vsel %vm366, %v368, %v364
        %v370 = vmul.f32 1.0, %v369
        %v371 = vrcp.pop %v353
        %v372 = vmul.f32 %v353, %v371
        %v373 = vsub.f32 1.0, %v372
        %v374 = vmul.f32 %v371, %v373
        %v375 = vadd.f32 %v371, %v374
        %vm376 = vweird.f32 %v353
        %vm377 = vweird.f32 %v371
        %vm378 = vmor %vm376, %vm377
        %v379 = vsel %vm378, %v371, %v375
        %v380 = vand.u32 2147483647, %v353
        %vm381 = vcmp.eq.f32.partialorder %v380, 8.507059e+37
        %v382 = vand.u32 %v353, 2147483648
        %v383 = vor.u32 1.1754944e-38, %v382
        %v384 = vsel %vm381, %v383, %v379
        %v385 = vmul.f32 1.0, %v384
        %v386 = vrcp.pop %v354
        %v387 = vmul.f32 %v354, %v386
        %v388 = vsub.f32 1.0, %v387
        %v389 = vmul.f32 %v386, %v388
        %v390 = vadd.f32 %v386, %v389
        %vm391 = vweird.f32 %v354
        %vm392 = vweird.f32 %v386
        %vm393 = vmor %vm391, %vm392
        %v394 = vsel %vm393, %v386, %v390
        %v395 = vand.u32 2147483647, %v354
        %vm396 = vcmp.eq.f32.partialorder %v395, 8.507059e+37
        %v397 = vand.u32 %v354, 2147483648
        %v398 = vor.u32 1.1754944e-38, %v397
        %v399 = vsel %vm396, %v398, %v394
        %v400 = vmul.f32 1.0, %v399
        %v401 = vrcp.pop %v355
        %v402 = vmul.f32 %v355, %v401
        %v403 = vsub.f32 1.0, %v402
        %v404 = vmul.f32 %v401, %v403
        %v405 = vadd.f32 %v401, %v404
        %vm406 = vweird.f32 %v355
        %vm407 = vweird.f32 %v401
        %vm408 = vmor %vm406, %vm407
        %v409 = vsel %vm408, %v401, %v405
        %v410 = vand.u32 2147483647, %v355
        %vm411 = vcmp.eq.f32.partialorder %v410, 8.507059e+37
        %v412 = vand.u32 %v355, 2147483648
        %v413 = vor.u32 1.1754944e-38, %v412
        %v414 = vsel %vm411, %v413, %v409
        %v415 = vmul.f32 1.0, %v414
        %v416 = vmul.f32 %v370, 1.2
        %v417 = vmul.f32 %v385, 1.2
        %v418 = vmul.f32 %v400, 1.2
        %v419 = vmul.f32 %v415, 1.2
        %v420 = vadd.f32 %v416, -0.1
        %v421 = vadd.f32 %v417, -0.1
        %v422 = vadd.f32 %v418, -0.1
        %v423 = vadd.f32 %v419, -0.1
        %v424 = vmax.f32 %v420, 0.0
        %v425 = vmax.f32 %v421, 0.0
        %v426 = vmax.f32 %v422, 0.0
        %v427 = vmax.f32 %v423, 0.0
        %v428 = vmin.f32 %v424, 1.0
        %v429 = vmin.f32 %v425, 1.0
        %v430 = vmin.f32 %v426, 1.0
        %v431 = vmin.f32 %v427, 1.0
        %v432 = vmul.f32 %v312, %v428
        %v433 = vmul.f32 %v335, %v429
        %v434 = vmul.f32 %v315, %v430
        %v435 = vmul.f32 %v338, %v431
        %v436 = vld [vmem:[%s2] sm:$0xff]
        %v437 = vld [vmem:[%s2 + $0x8] sm:$0xff]
        %v438 = vld [vmem:[%s2 + $0x10] sm:$0xff]
        %v439 = vld [vmem:[%s2 + $0x18] sm:$0xff]
        %v440 = vld [vmem:[%s4] sm:$0xff]
        %v441 = vld [vmem:[%s4 + $0x8] sm:$0xff]
        %v442 = vld [vmem:[%s4 + $0x10] sm:$0xff]
        %v443 = vld [vmem:[%s4 + $0x18] sm:$0xff]
        %445 = vset.pattern.permute.xlu0 0
        %446 = vperm.xlu0 %445, %v440
        %v447 = vpop.permute.xlu0 %446
        %450 = vset.pattern.permute.xlu0 0
        %451 = vperm.xlu0 %450, %v441
        %v452 = vpop.permute.xlu0 %451
        %455 = vset.pattern.permute.xlu0 0
        %456 = vperm.xlu0 %455, %v442
        %v457 = vpop.permute.xlu0 %456
        %460 = vset.pattern.permute.xlu0 0
        %461 = vperm.xlu0 %460, %v443
        %v462 = vpop.permute.xlu0 %461
        %vm464 = vcmask 130048
        %v466 = vsel %vm464, %v436, 0
        %v469 = vsel %vm464, %v437, 0
        %v472 = vsel %vm464, %v438, 0
        %v475 = vsel %vm464, %v439, 0
        %477 = vmatpush.msra.mxu0 0.0
        %478 = vmatpush.msra.mxu0 0.0
        %479 = vmatpush.msra.mxu0 0.0
        %480 = vmatpush.msra.mxu0 0.0
        %481 = vmatpush.msra.mxu0 0.0
        %482 = vmatpush.msra.mxu0 0.0
        %483 = vmatpush.msra.mxu0 0.0
        %484 = vmatpush.msra.mxu0 0.0
        %485 = vmatpush.msra.mxu0 0.0
        %486 = vmatpush.msra.mxu0 0.0
        %487 = vmatpush.msra.mxu0 0.0
        %488 = vmatpush.msra.mxu0 0.0
        %489 = vmatpush.msra.mxu0 0.0
        %490 = vmatpush.msra.mxu0 0.0
        %491 = vmatpush.msra.mxu0 %v434
        %492 = vmatpush.msra.mxu0 %v432
        %493 = vmatmul.f32.gmra.mxu0 %v466
        %v494 = vpop.f32.mrf.mxu0
        %v495 = vadd.f32 %v447, %v494
        %496 = vmatmul.f32.gmra.mxu0 %v469
        %v497 = vpop.f32.mrf.mxu0
        %v498 = vadd.f32 %v452, %v497
        %499 = vmatmul.f32.gmra.mxu0 %v472
        %v500 = vpop.f32.mrf.mxu0
        %v501 = vadd.f32 %v457, %v500
        %502 = vmatmul.f32.gmra.mxu0 %v475
        %v503 = vpop.f32.mrf.mxu0
        %v504 = vadd.f32 %v462, %v503
        %505 = vdwg.mxu0
        %506 = vmatpush.msra.mxu0 0.0
        %507 = vmatpush.msra.mxu0 0.0
        %508 = vmatpush.msra.mxu0 0.0
        %509 = vmatpush.msra.mxu0 0.0
        %510 = vmatpush.msra.mxu0 0.0
        %511 = vmatpush.msra.mxu0 0.0
        %512 = vmatpush.msra.mxu0 0.0
        %513 = vmatpush.msra.mxu0 0.0
        %514 = vmatpush.msra.mxu0 0.0
        %515 = vmatpush.msra.mxu0 0.0
        %516 = vmatpush.msra.mxu0 0.0
        %517 = vmatpush.msra.mxu0 0.0
        %518 = vmatpush.msra.mxu0 0.0
        %519 = vmatpush.msra.mxu0 0.0
        %520 = vmatpush.msra.mxu0 %v435
        %521 = vmatpush.msra.mxu0 %v433
        %522 = vmatmul.f32.gmra.mxu0 %v466
        %v523 = vpop.f32.mrf.mxu0
        %v524 = vadd.f32 %v447, %v523
        %525 = vmatmul.f32.gmra.mxu0 %v469
        %v526 = vpop.f32.mrf.mxu0
        %v527 = vadd.f32 %v452, %v526
        %528 = vmatmul.f32.gmra.mxu0 %v472
        %v529 = vpop.f32.mrf.mxu0
        %v530 = vadd.f32 %v457, %v529
        %531 = vmatmul.f32.gmra.mxu0 %v475
        %v532 = vpop.f32.mrf.mxu0
        %v533 = vadd.f32 %v462, %v532
        %534 = vdwg.mxu0
        %vm535 = vcmp.gt.f32.partialorder %v495, 0.0
        %vm536 = vcmp.gt.f32.partialorder %v524, 0.0
        %vm537 = vcmp.gt.f32.partialorder %v498, 0.0
        %vm538 = vcmp.gt.f32.partialorder %v527, 0.0
        %vm539 = vcmp.gt.f32.partialorder %v501, 0.0
        %vm540 = vcmp.gt.f32.partialorder %v530, 0.0
        %vm541 = vcmp.gt.f32.partialorder %v504, 0.0
        %vm542 = vcmp.gt.f32.partialorder %v533, 0.0
        %v543 = vmul.f32 %v495, 0.2
        %v544 = vmul.f32 %v524, 0.2
        %v545 = vmul.f32 %v498, 0.2
        %v546 = vmul.f32 %v527, 0.2
        %v547 = vmul.f32 %v501, 0.2
        %v548 = vmul.f32 %v530, 0.2
        %v549 = vmul.f32 %v504, 0.2
        %v550 = vmul.f32 %v533, 0.2
        %v551 = vsel %vm535, %v495, %v543
        %v552 = vsel %vm536, %v524, %v544
        %v553 = vsel %vm537, %v498, %v545
        %v554 = vsel %vm538, %v527, %v546
        %v555 = vsel %vm539, %v501, %v547
        %v556 = vsel %vm540, %v530, %v548
        %v557 = vsel %vm541, %v504, %v549
        %v558 = vsel %vm542, %v533, %v550
        %559 = vst [vmem:[%s262] sm:$0xff] %v551
        %560 = vst [vmem:[%s262 + $0x8] sm:$0xff] %v552
        %561 = vst [vmem:[%s262 + $0x10] sm:$0xff] %v553
        %562 = vst [vmem:[%s262 + $0x18] sm:$0xff] %v554
        %563 = vst [vmem:[%s262 + $0x20] sm:$0xff] %v555
        %564 = vst [vmem:[%s262 + $0x28] sm:$0xff] %v556
        %565 = vst [vmem:[%s262 + $0x30] sm:$0xff] %v557
        %566 = vst [vmem:[%s262 + $0x38] sm:$0xff] %v558
        %s567 = sand.u32 %s156, 1
        %s568 = scalar_lea.sflag [#allocation4], %s567
        %s569 = sand.u32 %s156, 1
        %s570 = smul.addr %s569, 64
        %s571 = scalar_lea.vmem [#allocation5], %s570
        // Predicated region
        $region45: #{tpu_custom_call.1} parent=39 // pred_check
          %p572 = pneg %p166
        $region46: #{tpu_custom_call.1} parent=39 // pred_check_branch
          %574 = sbr.rel (%p572) target = $region48
        $region47: #{tpu_custom_call.1} parent=39 // pred_region
          %s575 = smul.u32 2, %s27
          %577 = vsyncadd %s568, 0
          %s578 = smul.addr %s26, 8
          %s579 = sadd.s32 %s575, %s578
          %s580 = smul.addr %s579, 8
          %s581 = scalar_lea.hbm %s5, %s580
          %s582 = sshll.u32 %s571, 4
          %s583 = int_to_ptr.vmem [resolvable:$true] %s582
          %s584 = sshll.u32 %s581, 4
          %s585 = int_to_ptr.hbm [resolvable:$true] %s584
          %590 = dma.vmem_to_hbm [thread:$0]  %s583, 1024, %s585, %s568, 256, 256, 16
        $region48: #{tpu_custom_call.1} parent=39 // pred_fallthru
          _
      $region40: #{tpu_custom_call.1} parent=5 // pred_fallthru
        _
      %p591 = scmp.le.s32.totalorder 2, %s17
      // Predicated region
      $region49: #{tpu_custom_call.1} parent=5 // pred_check
        %p592 = pneg %p591
      $region50: #{tpu_custom_call.1} parent=5 // pred_check_branch
        %594 = sbr.rel (%p592) target = $region52
      $region51: #{tpu_custom_call.1} parent=5 // pred_region
        %s595 = ssub.s32 %s17, 2
        // Predicated region
        $region53: #{tpu_custom_call.1} parent=51 // pred_check
          %p596 = pneg %p172
        $region54: #{tpu_custom_call.1} parent=51 // pred_check_branch
          %598 = sbr.rel (%p596) target = $region56
        $region55: #{tpu_custom_call.1} parent=51 // pred_region
          %s599 = sand.u32 %s157, 1
          %s600 = scalar_lea.sflag [#allocation4], %s599
          %s601 = sand.u32 %s157, 1
          %s602 = smul.addr %s601, 64
          %s603 = scalar_lea.vmem [#allocation5], %s602
          %605 = dma.done %s600, 1024
        $region56: #{tpu_custom_call.1} parent=51 // pred_fallthru
          _
      $region52: #{tpu_custom_call.1} parent=5 // pred_fallthru
        _
    $region6: #{tpu_custom_call.1} parent=1 // loop_footer
      %s21 = sadd.s32 1, %s17
    $region7: #{tpu_custom_call.1} parent=1 // loop_footer_branch
      %16 = sbr.rel target = $region3
    $region8: #{tpu_custom_call.1} parent=1 // loop_exit
      _
    %606 = vsyncpa [#allocation3], 1
    %s607 = scalar_lea.sflag [#allocation3], 1
    %608 = vsyncpa %s607, 1
    %609 = vsyncpa [#allocation4], 1
    %s610 = scalar_lea.sflag [#allocation4], 1
    %611 = vsyncpa %s610, 1

</llo_original>
